<compile_context>
chip_gen: v5e
topology: v5e:2x2
jax: 0.10.0
libtpu: 0.0.40
codegen_flags: <defaults>
</compile_context>

<pallas_src>
import functools

import jax
import jax.numpy as jnp
from jax.experimental import pallas as pl
from jax.experimental.pallas import tpu as pltpu


def _round_up(x, m):
    return ((x + m - 1) // m) * m


def _sublayer_connection_kernel(x_ref, a2_ref, b2_ref, w_ref, bias_ref,
                                o_ref, normed_ref, *, h_true, eps, ct,
                                approx_recip):
    # x_ref:      (TM, Hp)  full feature row tile (resident across all j)
    # a2/b2:      (1, Hp)   LayerNorm affine params (zero-padded)
    # w_ref:      (Hp, TN)  weight column block (zero-padded, MXU dtype)
    # bias_ref:   (1, TN)   bias column block
    # o_ref:      (TM, TN)  output block
    # normed_ref: (TM, Hp)  VMEM scratch caching LayerNorm(x) across the j loop
    j = pl.program_id(1)

    # LayerNorm is computed once per row tile (j == 0) and cached; the weight
    # column axis only re-reads the cached result, so the two row reductions,
    # EUP reciprocal, affine and bf16 cast are not repeated nj times.
    @pl.when(j == 0)
    def _compute_layernorm():
        x = x_ref[...].astype(jnp.float32)
        hp = x.shape[-1]
        if h_true != hp:
            # Padded lanes must not pollute mean / var.
            lane = jax.lax.broadcasted_iota(jnp.int32, (1, hp), 1)
            mask = (lane < h_true).astype(jnp.float32)
            xm = x * mask
        else:
            mask = None
            xm = x

        # Torch-as-written LayerNorm: unbiased std, eps added to the std.
        mean = jnp.sum(xm, axis=-1, keepdims=True) * (1.0 / h_true)
        centered = x - mean
        if mask is not None:
            centered = centered * mask
        denom = max(h_true - 1, 1)  # guard the degenerate H == 1 case
        var_unbiased = jnp.sum(centered * centered, axis=-1,
                               keepdims=True) * (1.0 / denom)
        std = jnp.sqrt(var_unbiased)
        # NOTE: padded rows (all-zero x) give std == 0 -> inv ~= 1/eps, which is
        # large but finite; a2*centered == 0 there and those rows are sliced
        # off by the wrapper, so this is intentionally NOT a NaN path.
        inv = pl.reciprocal(std + eps, approx=approx_recip)   # EUP, not VALU
        normed = (a2_ref[...] * centered) * inv + b2_ref[...]
        # Padded lanes: a2 = b2 = 0 -> normed = 0, so padded W rows add nothing.
        normed_ref[...] = normed.astype(normed_ref.dtype)

    # Synthetic sublayer: dense linear on the MXU, f32 accumulate.
    sub = jnp.dot(normed_ref[...], w_ref[...],
                  preferred_element_type=jnp.float32)
    sub = sub + bias_ref[...].astype(jnp.float32)

    # Residual strip sliced from the already-resident row tile (no second HBM
    # stream of x).  Dropout is identity (eval mode).
    col = pl.multiple_of(j * ct, 128)
    x_strip = x_ref[:, pl.ds(col, ct)].astype(jnp.float32)
    o_ref[...] = (x_strip + sub).astype(o_ref.dtype)


def prepare_sublayer_params(a2, b2, w, bias, *, mxu_dtype=jnp.bfloat16):
    """Pad to lane multiples and cast W for the MXU, ONCE (outside the hot path).

    Pass mxu_dtype=jnp.float32 for a validation-precision path.
    """
    H = w.shape[0]
    h_pad = _round_up(H, 128)
    a2p = jnp.pad(a2, (0, h_pad - H)).reshape(1, h_pad).astype(jnp.float32)
    b2p = jnp.pad(b2, (0, h_pad - H)).reshape(1, h_pad).astype(jnp.float32)
    wp = jnp.pad(w, ((0, h_pad - H), (0, h_pad - H))).astype(mxu_dtype)
    biasp = jnp.pad(bias, (0, h_pad - H)).reshape(1, h_pad).astype(jnp.float32)
    return a2p, b2p, wp, biasp


def sublayer_connection(x, a2p, b2p, wp, biasp, *, eps=1e-6, row_tile=None,
                        col_tile=512, approx_recip=True):
    """x: [B, S, H]. a2p/b2p/biasp: [1, Hp]. wp: [Hp, Hp] (pre-padded, pre-cast)."""
    B, S, H = x.shape
    h_pad = wp.shape[0]
    assert wp.shape == (h_pad, h_pad) and h_pad % 128 == 0 and h_pad >= H
    rows = B * S
    x_bytes = jnp.dtype(x.dtype).itemsize
    mxu_bytes = jnp.dtype(wp.dtype).itemsize

    # --- VMEM budget: ~80% of physical capacity (never request it all) ---
    try:
        vmem_cap = pltpu.get_tpu_info().vmem_capacity_bytes
    except Exception:  # fallback if hardware query is unavailable
        vmem_cap = 128 * 1024 * 1024
    vmem_budget = int(0.8 * vmem_cap)

    # --- column tile: lane-dense (multiple of 128) and divides h_pad ---
    ct = min(col_tile, h_pad)
    ct = max(128, (ct // 128) * 128)
    while h_pad % ct != 0:
        ct -= 128

    # --- row tile: large enough that the re-streamed W column blocks cross the
    # HBM ridge (~1024 rows on 128 MiB-VMEM parts, ~448 on 64 MiB parts),
    # clamped by `rows` and by the actual double-buffered VMEM footprint. ---
    if row_tile is None:
        row_tile = 1024 if vmem_cap >= (96 << 20) else 448
    rt = min(row_tile, _round_up(rows, 8))
    rt = max(8, (rt // 8) * 8)

    def footprint(rt_, ct_):
        return (2 * rt_ * h_pad * x_bytes        # x row tile (double-buffered)
                + rt_ * h_pad * mxu_bytes        # cached normed scratch (single)
                + 2 * h_pad * ct_ * mxu_bytes    # W column block (double-buffered)
                + 2 * rt_ * ct_ * x_bytes        # output block (double-buffered)
                + 8 * h_pad * 4)                 # a2 / b2 / bias (small)

    while footprint(rt, ct) > vmem_budget and rt > 64:
        rt = max(64, ((rt // 2) // 8) * 8)
    while footprint(rt, ct) > vmem_budget and ct > 128:
        ct -= 128
        while h_pad % ct != 0:
            ct -= 128
    # TODO(synk): if the footprint still exceeds budget (H >= 8K on v7x), add a
    # K-reduction grid axis with an f32 accumulator scratch instead of shrinking.

    rows_pad = _round_up(rows, rt)
    grid = (rows_pad // rt, h_pad // ct)

    vmem_limit = int(min(max(2 * footprint(rt, ct), 32 * 1024 * 1024),
                         vmem_budget))

    x2 = x.reshape(rows, H)
    x2p = jnp.pad(x2, ((0, rows_pad - rows), (0, h_pad - H)))

    kernel = functools.partial(_sublayer_connection_kernel, h_true=H, eps=eps,
                               ct=ct, approx_recip=approx_recip)

    out2 = pl.pallas_call(
        kernel,
        out_shape=jax.ShapeDtypeStruct((rows_pad, h_pad), x.dtype),
        grid_spec=pltpu.PrefetchScalarGridSpec(
            num_scalar_prefetch=0,
            grid=grid,
            in_specs=[
                pl.BlockSpec((rt, h_pad), lambda i, j: (i, 0)),   # x row tile
                pl.BlockSpec((1, h_pad), lambda i, j: (0, 0)),    # a_2
                pl.BlockSpec((1, h_pad), lambda i, j: (0, 0)),    # b_2
                pl.BlockSpec((h_pad, ct), lambda i, j: (0, j)),   # W column block
                pl.BlockSpec((1, ct), lambda i, j: (0, j)),       # bias block
            ],
            out_specs=pl.BlockSpec((rt, ct), lambda i, j: (i, j)),
            scratch_shapes=[pltpu.VMEM((rt, h_pad), wp.dtype)],   # cached LN(x)
        ),
        compiler_params=pltpu.CompilerParams(
            # j (weight-column axis) carries the cached-LayerNorm dependency.
            dimension_semantics=("parallel", "arbitrary"),
            vmem_limit_bytes=vmem_limit,
        ),
    )(x2p, a2p, b2p, wp, biasp)

    return out2[:rows, :H].reshape(B, S, H)


def _reference(x, a2, b2, w, bias, eps=1e-6):
    H = x.shape[-1]
    mean = jnp.mean(x, axis=-1, keepdims=True)
    centered = x - mean
    var_unbiased = jnp.sum(centered * centered, axis=-1, keepdims=True) / (H - 1)
    std = jnp.sqrt(var_unbiased)
    normed = a2 * centered / (std + eps) + b2
    sub = normed @ w + bias
    return x + sub


if __name__ == "__main__":
    # Small, lane-dense shapes: batch=2, seq=8, hidden=128.
    B, S, H = 2, 8, 128

    key = jax.random.PRNGKey(0)
    kx, kw, kb = jax.random.split(key, 3)

    x = jax.random.normal(kx, (B, S, H), dtype=jnp.float32)

    # LayerNorm params (as in __init__: ones / zeros).
    a2 = jnp.ones((H,), dtype=jnp.float32)
    b2 = jnp.zeros((H,), dtype=jnp.float32)

    # Deterministic synthetic sublayer (linear) weights.
    w = jax.random.normal(kw, (H, H), dtype=jnp.float32) * (1.0 / jnp.sqrt(H))
    bias = jax.random.normal(kb, (H,), dtype=jnp.float32) * 0.01

    # Parameter padding / bf16 cast done ONCE (not per forward call).
    a2p, b2p, wp, biasp = prepare_sublayer_params(a2, b2, w, bias)

    out = sublayer_connection(x, a2p, b2p, wp, biasp)
    out = jax.block_until_ready(out)

    ref = _reference(x, a2, b2, w, bias)
    assert out.shape == (B, S, H)
    # Tolerance reflects the documented precision choice: bf16 MXU operands +
    # approx EUP reciprocal (f32 accumulate + f32 residual bound the error).
    # For exact validation use prepare_sublayer_params(..., mxu_dtype=jnp.float32)
    # and sublayer_connection(..., approx_recip=False).
    assert jnp.allclose(out, ref, atol=5e-2, rtol=5e-2)

    print("KERNEL_OK")
</pallas_src>

<mosaic_0001>
module attributes {stable_mosaic.version = 11 : i64} {
  func.func @_sublayer_connection_kernel(%arg0: i32, %arg1: i32, %arg2: memref<16x128xf32, #tpu.memory_space<vmem>>, %arg3: memref<1x128xf32, #tpu.memory_space<vmem>>, %arg4: memref<1x128xf32, #tpu.memory_space<vmem>>, %arg5: memref<128x128xbf16, #tpu.memory_space<vmem>>, %arg6: memref<1x128xf32, #tpu.memory_space<vmem>>, %arg7: memref<16x128xf32, #tpu.memory_space<vmem>>, %arg8: memref<16x128xbf16, #tpu.memory_space<vmem>>) attributes {dimension_semantics = [#tpu.dimension_semantics<parallel>, #tpu.dimension_semantics<arbitrary>], iteration_bounds = array<i64: 1, 1>, scalar_prefetch = 0 : i64, scratch_operands = 1 : i64, tpu.core_type = #tpu.core_type<tc>, window_params = [{transform_indices = @transform_0, window_bounds = array<i64: 16, 128>}, {pipeline_mode = #tpu.pipeline_mode<synchronous>, transform_indices = @transform_1, window_bounds = array<i64: 1, 128>}, {pipeline_mode = #tpu.pipeline_mode<synchronous>, transform_indices = @transform_2, window_bounds = array<i64: 1, 128>}, {transform_indices = @transform_3, window_bounds = array<i64: 128, 128>}, {transform_indices = @transform_4, window_bounds = array<i64: 1, 128>}, {transform_indices = @transform_5, window_bounds = array<i64: 16, 128>}]} {
    %c0_i32 = arith.constant 0 : i32
    %0 = arith.cmpi eq, %arg1, %c0_i32 : i32
    %1 = arith.extui %0 : i1 to i32
    %c0_i32_0 = arith.constant 0 : i32
    %2 = arith.cmpi ne, %1, %c0_i32_0 : i32
    scf.if %2 {
      %c0_9 = arith.constant 0 : index
      %c0_10 = arith.constant 0 : index
      %15 = vector.load %arg2[%c0_9, %c0_10] : memref<16x128xf32, #tpu.memory_space<vmem>>, vector<16x128xf32>
      %cst_11 = arith.constant dense<0.000000e+00> : vector<16xf32>
      %16 = vector.multi_reduction <add>, %15, %cst_11 [1] : vector<16x128xf32> to vector<16xf32>
      %17 = vector.shape_cast %16 : vector<16xf32> to vector<16x1xf32>
      %cst_12 = arith.constant 7.812500e-03 : f32
      %18 = vector.broadcast %cst_12 : f32 to vector<16x1xf32>
      %19 = arith.mulf %17, %18 : vector<16x1xf32>
      %20 = vector.broadcast %19 : vector<16x1xf32> to vector<16x128xf32>
      %21 = arith.subf %15, %20 : vector<16x128xf32>
      %22 = arith.mulf %21, %21 : vector<16x128xf32>
      %cst_13 = arith.constant dense<0.000000e+00> : vector<16xf32>
      %23 = vector.multi_reduction <add>, %22, %cst_13 [1] : vector<16x128xf32> to vector<16xf32>
      %24 = vector.shape_cast %23 : vector<16xf32> to vector<16x1xf32>
      %cst_14 = arith.constant 0.00787401571 : f32
      %25 = vector.broadcast %cst_14 : f32 to vector<16x1xf32>
      %26 = arith.mulf %24, %25 : vector<16x1xf32>
      %27 = math.sqrt %26 : vector<16x1xf32>
      %cst_15 = arith.constant 9.99999997E-7 : f32
      %28 = vector.broadcast %cst_15 : f32 to vector<16x1xf32>
      %29 = arith.addf %27, %28 : vector<16x1xf32>
      %30 = tpu.reciprocal %29 {approx = true} : vector<16x1xf32> -> vector<16x1xf32>
      %c0_16 = arith.constant 0 : index
      %c0_17 = arith.constant 0 : index
      %31 = vector.load %arg3[%c0_16, %c0_17] : memref<1x128xf32, #tpu.memory_space<vmem>>, vector<1x128xf32>
      %32 = vector.broadcast %31 : vector<1x128xf32> to vector<16x128xf32>
      %33 = arith.mulf %32, %21 : vector<16x128xf32>
      %34 = vector.broadcast %30 : vector<16x1xf32> to vector<16x128xf32>
      %35 = arith.mulf %33, %34 : vector<16x128xf32>
      %c0_18 = arith.constant 0 : index
      %c0_19 = arith.constant 0 : index
      %36 = vector.load %arg4[%c0_18, %c0_19] : memref<1x128xf32, #tpu.memory_space<vmem>>, vector<1x128xf32>
      %37 = vector.broadcast %36 : vector<1x128xf32> to vector<16x128xf32>
      %38 = arith.addf %35, %37 : vector<16x128xf32>
      %39 = arith.truncf %38 : vector<16x128xf32> to vector<16x128xbf16>
      %c0_20 = arith.constant 0 : index
      %c0_21 = arith.constant 0 : index
      %40 = vector.load %arg8[%c0_20, %c0_21] : memref<16x128xbf16, #tpu.memory_space<vmem>>, vector<16x128xbf16>
      tpu.vector_store %arg8[%c0_20, %c0_21], %39 {strides = array<i32>} : memref<16x128xbf16, #tpu.memory_space<vmem>>, vector<16x128xbf16>,
    } else {
    }
    %c0 = arith.constant 0 : index
    %c0_1 = arith.constant 0 : index
    %3 = vector.load %arg8[%c0, %c0_1] : memref<16x128xbf16, #tpu.memory_space<vmem>>, vector<16x128xbf16>
    %c0_2 = arith.constant 0 : index
    %c0_3 = arith.constant 0 : index
    %4 = vector.load %arg5[%c0_2, %c0_3] : memref<128x128xbf16, #tpu.memory_space<vmem>>, vector<128x128xbf16>
    %cst = arith.constant dense<0.000000e+00> : vector<16x128xf32>
    %5 = tpu.matmul %3, %4, %cst {dimension_numbers = #tpu.dot_dimension_numbers<[1], [0], [0], [1], [0, 0, 1, 1], [], []>} : vector<16x128xbf16>, vector<128x128xbf16>, vector<16x128xf32> -> vector<16x128xf32>
    %c0_4 = arith.constant 0 : index
    %c0_5 = arith.constant 0 : index
    %6 = vector.load %arg6[%c0_4, %c0_5] : memref<1x128xf32, #tpu.memory_space<vmem>>, vector<1x128xf32>
    %7 = vector.broadcast %6 : vector<1x128xf32> to vector<16x128xf32>
    %8 = arith.addf %5, %7 : vector<16x128xf32>
    %c128_i32 = arith.constant 128 : i32
    %9 = arith.muli %arg1, %c128_i32 : i32
    %10 = tpu.assume_multiple %9, 128 : i32
    %c0_6 = arith.constant 0 : index
    %11 = arith.index_cast %10 : i32 to index
    %12 = vector.load %arg2[%c0_6, %11] : memref<16x128xf32, #tpu.memory_space<vmem>>, vector<16x128xf32>
    %13 = arith.addf %12, %8 : vector<16x128xf32>
    %c0_7 = arith.constant 0 : index
    %c0_8 = arith.constant 0 : index
    %14 = vector.load %arg7[%c0_7, %c0_8] : memref<16x128xf32, #tpu.memory_space<vmem>>, vector<16x128xf32>
    tpu.vector_store %arg7[%c0_7, %c0_8], %13 {strides = array<i32>} : memref<16x128xf32, #tpu.memory_space<vmem>>, vector<16x128xf32>,
    return
  }
  func.func @transform_0(%arg0: i32, %arg1: i32) -> (i32, i32) {
    %c0_i32 = arith.constant 0 : i32
    %c0_i32_0 = arith.constant 0 : i32
    return %arg0, %c0_i32 : i32, i32
  }
  func.func @transform_1(%arg0: i32, %arg1: i32) -> (i32, i32) {
    %c0_i32 = arith.constant 0 : i32
    %c0_i32_0 = arith.constant 0 : i32
    %c0_i32_1 = arith.constant 0 : i32
    return %c0_i32, %c0_i32_0 : i32, i32
  }
  func.func @transform_2(%arg0: i32, %arg1: i32) -> (i32, i32) {
    %c0_i32 = arith.constant 0 : i32
    %c0_i32_0 = arith.constant 0 : i32
    %c0_i32_1 = arith.constant 0 : i32
    return %c0_i32, %c0_i32_0 : i32, i32
  }
  func.func @transform_3(%arg0: i32, %arg1: i32) -> (i32, i32) {
    %c0_i32 = arith.constant 0 : i32
    %c0_i32_0 = arith.constant 0 : i32
    return %c0_i32, %arg1 : i32, i32
  }
  func.func @transform_4(%arg0: i32, %arg1: i32) -> (i32, i32) {
    %c0_i32 = arith.constant 0 : i32
    %c0_i32_0 = arith.constant 0 : i32
    return %c0_i32, %arg1 : i32, i32
  }
  func.func @transform_5(%arg0: i32, %arg1: i32) -> (i32, i32) {
    %c0_i32 = arith.constant 0 : i32
    return %arg0, %arg1 : i32, i32
  }
}

</mosaic_0001>

<llo_original>
// kernel: tpu_custom_call.1
$region0: #{tpu_custom_call.1}
  #allocation0 [shape = 'u32[]', space=smem, size = 0x4, offset = 0x4, fixed_abs, tag = 'smem constant byte address 0x4 - core index']
  #allocation1 [shape = 'u32[72,128]{1,0:T(1,128)}', space=vmem, size = 0x9000, scoped, tag = 'internal scratch']
  #allocation2 [shape = 'bf16[16,128]{1,0:T(8,128)(2,1)}', space=vmem, size = 0x1000, scoped, tag = 'scratch operand']
  %s0 = inlined_call_operand.hbm [shape: f32[16,128], index: 0, kind: input, shape index: {}]
  %s1 = inlined_call_operand.hbm [shape: f32[1,128], index: 1, kind: input, shape index: {}]
  %s2 = inlined_call_operand.vmem [shape: f32[1,128], index: 2, kind: input, shape index: {}]
  %s3 = inlined_call_operand.hbm [shape: bf16[128,128], index: 3, kind: input, shape index: {}]
  %s4 = inlined_call_operand.vmem [shape: f32[1,128], index: 4, kind: input, shape index: {}]
  %s5 = inlined_call_operand.hbm [shape: f32[16,128], index: 5, kind: output, shape index: {}]
  %s6 = sld [smem:[#allocation0]]
  $region46: #{tpu_custom_call.1} parent=0
    _
  %s8 = ssub.s32 1, %s6
  %s9 = scalar_select 0, %s8, %s6
  $region1: #{tpu_custom_call.1} parent=0
    #allocation3 [shape = 'u8[8192]{0}', space=vmem, size = 0x2000, scoped, tag = 'input window, operand 0, single buffered']
    #allocation4 [shape = 's32[1]{0}', space=sflag, size = 0x4, scoped, tag = 'scoped memory for tpu_custom_call.1']
    #allocation5 [shape = 's32[1]{0}', space=sflag, size = 0x4, scoped, tag = 'scoped memory for tpu_custom_call.1']
    #allocation6 [shape = 'u8[512]{0}', space=vmem, size = 0x400, scoped, tag = 'input window, operand 1, single buffered']
    #allocation7 [shape = 's32[1]{0}', space=sflag, size = 0x4, scoped, tag = 'scoped memory for tpu_custom_call.1']
    #allocation8 [shape = 'u8[32768]{0}', space=vmem, size = 0x8000, scoped, tag = 'input window, operand 3, single buffered']
    #allocation9 [shape = 'u8[8192]{0}', space=vmem, size = 0x2000, scoped, tag = 'output window, operand 0, single buffered']
    %10 = vsyncpa [#allocation4], 0
    %11 = vsyncpa [#allocation7], 0
    %12 = vsyncpa [#allocation5], 0
    // Predicated region
    $region2: #{tpu_custom_call.1} parent=1 // pred_check
      _
    $region3: #{tpu_custom_call.1} parent=1 // pred_check_branch
      %14 = sbr.rel (0) target = $region5
    $region4: #{tpu_custom_call.1} parent=1 // pred_region
      %16 = vsyncadd [#allocation4], 0
      %s17 = sshll.u32 %s0, 4
      %s18 = int_to_ptr.hbm [resolvable:$true] %s17
      %s19 = sshll.u32 [#allocation3], 4
      %s20 = int_to_ptr.vmem [resolvable:$true] %s19
      %25 = dma.hbm_to_vmem [thread:$0]  %s18, 256, %s20, [#allocation4], 128, 128, 8
    $region5: #{tpu_custom_call.1} parent=1 // pred_fallthru
      _
    // Predicated region
    $region6: #{tpu_custom_call.1} parent=1 // pred_check
      _
    $region7: #{tpu_custom_call.1} parent=1 // pred_check_branch
      %27 = sbr.rel (0) target = $region9
    $region8: #{tpu_custom_call.1} parent=1 // pred_region
      %29 = vsyncadd [#allocation7], 0
      %s31 = sshll.u32 %s1, 4
      %s32 = int_to_ptr.hbm [resolvable:$true] %s31
      %s33 = sshll.u32 [#allocation6], 4
      %s34 = int_to_ptr.vmem [resolvable:$true] %s33
      %36 = dma.hbm_to_vmem [thread:$0]  %s32, 16, %s34, [#allocation7]
    $region9: #{tpu_custom_call.1} parent=1 // pred_fallthru
      _
    // Predicated region
    $region10: #{tpu_custom_call.1} parent=1 // pred_check
      _
    $region11: #{tpu_custom_call.1} parent=1 // pred_check_branch
      %38 = sbr.rel (0) target = $region13
    $region12: #{tpu_custom_call.1} parent=1 // pred_region
      _
    $region13: #{tpu_custom_call.1} parent=1 // pred_fallthru
      _
    // Predicated region
    $region14: #{tpu_custom_call.1} parent=1 // pred_check
      _
    $region15: #{tpu_custom_call.1} parent=1 // pred_check_branch
      %40 = sbr.rel (0) target = $region17
    $region16: #{tpu_custom_call.1} parent=1 // pred_region
      %42 = vsyncadd [#allocation7], 0
      %s43 = sshll.u32 %s3, 4
      %s44 = int_to_ptr.hbm [resolvable:$true] %s43
      %s45 = sshll.u32 [#allocation8], 4
      %s46 = int_to_ptr.vmem [resolvable:$true] %s45
      %51 = dma.hbm_to_vmem [thread:$0]  %s44, 1024, %s46, [#allocation7], 64, 64, 4
    $region17: #{tpu_custom_call.1} parent=1 // pred_fallthru
      _
    // Predicated region
    $region18: #{tpu_custom_call.1} parent=1 // pred_check
      _
    $region19: #{tpu_custom_call.1} parent=1 // pred_check_branch
      %53 = sbr.rel (0) target = $region21
    $region20: #{tpu_custom_call.1} parent=1 // pred_region
      _
    $region21: #{tpu_custom_call.1} parent=1 // pred_fallthru
      _
    // Predicated region
    $region22: #{tpu_custom_call.1} parent=1 // pred_check
      _
    $region23: #{tpu_custom_call.1} parent=1 // pred_check_branch
      %55 = sbr.rel (0) target = $region25
    $region24: #{tpu_custom_call.1} parent=1 // pred_region
      %57 = dma.done [#allocation4], 256
    $region25: #{tpu_custom_call.1} parent=1 // pred_fallthru
      _
    // Predicated region
    $region26: #{tpu_custom_call.1} parent=1 // pred_check
      _
    $region27: #{tpu_custom_call.1} parent=1 // pred_check_branch
      %59 = sbr.rel (0) target = $region29
    $region28: #{tpu_custom_call.1} parent=1 // pred_region
      %61 = dma.done [#allocation7], 16
    $region29: #{tpu_custom_call.1} parent=1 // pred_fallthru
      _
    // Predicated region
    $region30: #{tpu_custom_call.1} parent=1 // pred_check
      _
    $region31: #{tpu_custom_call.1} parent=1 // pred_check_branch
      %63 = sbr.rel (0) target = $region33
    $region32: #{tpu_custom_call.1} parent=1 // pred_region
      %65 = dma.done [#allocation7], 1024
    $region33: #{tpu_custom_call.1} parent=1 // pred_fallthru
      _
    %p66 = scmp.eq.s32.totalorder 0, 0
    // Predicated region
    $region34: #{tpu_custom_call.1} parent=1 // pred_check
      %p67 = pneg %p66
    $region35: #{tpu_custom_call.1} parent=1 // pred_check_branch
      %69 = sbr.rel (%p67) target = $region37
    $region36: #{tpu_custom_call.1} parent=1 // pred_region
      %v70 = vld [vmem:[#allocation3] sm:$0xff]
      %v71 = vld [vmem:[#allocation3 + $0x8] sm:$0xff]
      %72 = vadd.xlane.f32.xlu0 %v70
      %v73 = vpop.xlane.xlu0 %72
      %74 = vadd.xlane.f32.xlu0 %v71
      %v75 = vpop.xlane.xlu0 %74
      %v76 = vmul.f32 %v73, 0.0078125
      %v77 = vmul.f32 %v75, 0.0078125
      %v78 = vsub.f32 %v70, %v76
      %v79 = vsub.f32 %v71, %v77
      %v80 = vmul.f32 %v78, %v78
      %v81 = vmul.f32 %v79, %v79
      %82 = vadd.xlane.f32.xlu0 %v80
      %v83 = vpop.xlane.xlu0 %82
      %84 = vadd.xlane.f32.xlu0 %v81
      %v85 = vpop.xlane.xlu0 %84
      %v86 = vmul.f32 %v83, 0.007874016
      %v87 = vmul.f32 %v85, 0.007874016
      %v88 = vrsqrt.pop %v86
      %v89 = vmul.f32 %v88, %v86
      %v90 = vmul.f32 %v89, %v88
      %v91 = vmul.f32 0.5, %v90
      %v92 = vsub.f32 1.5, %v91
      %v93 = vmul.f32 %v88, %v92
      %v94 = vmul.f32 %v86, %v93
      %vm95 = vcmp.eq.f32.partialorder %v86, inf
      %v96 = vsel %vm95, %v86, %v94
      %vm97 = vcmp.eq.f32.partialorder %v86, 0.0
      %v98 = vand.u32 %v86, 2147483648
      %v99 = vsel %vm97, %v98, %v96
      %v100 = vrsqrt.pop %v87
      %v101 = vmul.f32 %v100, %v87
      %v102 = vmul.f32 %v101, %v100
      %v103 = vmul.f32 0.5, %v102
      %v104 = vsub.f32 1.5, %v103
      %v105 = vmul.f32 %v100, %v104
      %v106 = vmul.f32 %v87, %v105
      %vm107 = vcmp.eq.f32.partialorder %v87, inf
      %v108 = vsel %vm107, %v87, %v106
      %vm109 = vcmp.eq.f32.partialorder %v87, 0.0
      %v110 = vand.u32 %v87, 2147483648
      %v111 = vsel %vm109, %v110, %v108
      %v112 = vadd.f32 %v99, 1e-06
      %v113 = vadd.f32 %v111, 1e-06
      %v114 = vrcp.pop %v112
      %v115 = vrcp.pop %v113
      %v116 = vld [vmem:[#allocation6] sm:$0x1]
      %v118 = vperm.slane %v116, 0
      %v120 = vmul.f32 %v118, %v78
      %v121 = vmul.f32 %v118, %v79
      %v122 = vmul.f32 %v120, %v114
      %v123 = vmul.f32 %v121, %v115
      %v124 = vld [vmem:[%s2] sm:$0x1]
      %v126 = vperm.slane %v124, 0
      %v128 = vadd.f32 %v122, %v126
      %v129 = vadd.f32 %v123, %v126
      %v130 = vpack.c.bf16 %v128, %v128
      %v131 = vpack.c.bf16 %v129, %v129
      %132 = vst [vmem:[#allocation2] sm:$0xf] %v130
      %133 = vst [vmem:[#allocation2 + $0x4] sm:$0xf] %v131
    $region37: #{tpu_custom_call.1} parent=1 // pred_fallthru
      _
    %v134 = vld [vmem:[#allocation2] sm:$0xf]
    %v135 = vld [vmem:[#allocation2 + $0x4] sm:$0xf]
    %v136 = vld [vmem:[#allocation8] sm:$0xf]
    %v137 = vld [vmem:[#allocation8 + $0x4] sm:$0xf]
    %v138 = vld [vmem:[#allocation8 + $0x8] sm:$0xf]
    %v139 = vld [vmem:[#allocation8 + $0xc] sm:$0xf]
    %v140 = vld [vmem:[#allocation8 + $0x10] sm:$0xf]
    %v141 = vld [vmem:[#allocation8 + $0x14] sm:$0xf]
    %v142 = vld [vmem:[#allocation8 + $0x18] sm:$0xf]
    %v143 = vld [vmem:[#allocation8 + $0x1c] sm:$0xf]
    %v144 = vld [vmem:[#allocation8 + $0x20] sm:$0xf]
    %v145 = vld [vmem:[#allocation8 + $0x24] sm:$0xf]
    %v146 = vld [vmem:[#allocation8 + $0x28] sm:$0xf]
    %v147 = vld [vmem:[#allocation8 + $0x2c] sm:$0xf]
    %v148 = vld [vmem:[#allocation8 + $0x30] sm:$0xf]
    %v149 = vld [vmem:[#allocation8 + $0x34] sm:$0xf]
    %v150 = vld [vmem:[#allocation8 + $0x38] sm:$0xf]
    %v151 = vld [vmem:[#allocation8 + $0x3c] sm:$0xf]
    %v152 = vld [vmem:[%s4] sm:$0x1]
    %v154 = vperm.slane %v152, 0
    %v158 = vunpack.c.l.b16 %v134
    %v159 = vunpack.c.l.b16 %v135
    %v160 = vpack.c.b16 %v159, %v158
    %v178 = vunpack.c.l.b16 %v136
    %v179 = vunpack.c.l.b16 %v137
    %v180 = vunpack.c.l.b16 %v138
    %v181 = vunpack.c.l.b16 %v139
    %v182 = vunpack.c.l.b16 %v140
    %v183 = vunpack.c.l.b16 %v141
    %v184 = vunpack.c.l.b16 %v142
    %v185 = vunpack.c.l.b16 %v143
    %v186 = vunpack.c.l.b16 %v144
    %v187 = vunpack.c.l.b16 %v145
    %v188 = vunpack.c.l.b16 %v146
    %v189 = vunpack.c.l.b16 %v147
    %v190 = vunpack.c.l.b16 %v148
    %v191 = vunpack.c.l.b16 %v149
    %v192 = vunpack.c.l.b16 %v150
    %v193 = vunpack.c.l.b16 %v151
    %v194 = vpack.c.b16 %v179, %v178
    %v195 = vpack.c.b16 %v181, %v180
    %v196 = vpack.c.b16 %v183, %v182
    %v197 = vpack.c.b16 %v185, %v184
    %v198 = vpack.c.b16 %v187, %v186
    %v199 = vpack.c.b16 %v189, %v188
    %v200 = vpack.c.b16 %v191, %v190
    %v201 = vpack.c.b16 %v193, %v192
    %210 = vmatpush.bf16.msra.mxu0 %v201
    %211 = vmatpush.bf16.msra.mxu0 %v200
    %212 = vmatpush.bf16.msra.mxu0 %v199
    %213 = vmatpush.bf16.msra.mxu0 %v198
    %214 = vmatpush.bf16.msra.mxu0 %v197
    %215 = vmatpush.bf16.msra.mxu0 %v196
    %216 = vmatpush.bf16.msra.mxu0 %v195
    %217 = vmatpush.bf16.msra.mxu0 %v194
    %218 = vmatmul.bf16.gmra.mxu0 %v160
    %v219 = vpop.f32.mrf.mxu0
    %v220 = vadd.f32 %v154, %v219
    %v221 = vpop.f32.mrf.mxu0
    %v222 = vadd.f32 %v154, %v221
    %223 = vdwg.mxu0
    %s224 = smul.u32 0, 128
    %s225 = sshra.s32 %s224, 7
    %s226 = sand.u32 %s224, 127
    %s227 = scalar_lea.vmem [#allocation3], %s225
    %v228 = vld [vmem:[%s227] sm:$0xff]
    %v229 = vld [vmem:[%s227 + $0x8] sm:$0xff]
    %v230 = vadd.f32 %v228, %v220
    %v231 = vadd.f32 %v229, %v222
    %232 = vst [vmem:[#allocation9] sm:$0xff] %v230
    %233 = vst [vmem:[#allocation9 + $0x8] sm:$0xff] %v231
    // Predicated region
    $region38: #{tpu_custom_call.1} parent=1 // pred_check
      _
    $region39: #{tpu_custom_call.1} parent=1 // pred_check_branch
      %235 = sbr.rel (0) target = $region41
    $region40: #{tpu_custom_call.1} parent=1 // pred_region
      %237 = vsyncadd [#allocation5], 0
      %s238 = sshll.u32 [#allocation9], 4
      %s239 = int_to_ptr.vmem [resolvable:$true] %s238
      %s240 = sshll.u32 %s5, 4
      %s241 = int_to_ptr.hbm [resolvable:$true] %s240
      %246 = dma.vmem_to_hbm [thread:$0]  %s239, 256, %s241, [#allocation5], 128, 128, 8
    $region41: #{tpu_custom_call.1} parent=1 // pred_fallthru
      _
    // Predicated region
    $region42: #{tpu_custom_call.1} parent=1 // pred_check
      _
    $region43: #{tpu_custom_call.1} parent=1 // pred_check_branch
      %248 = sbr.rel (0) target = $region45
    $region44: #{tpu_custom_call.1} parent=1 // pred_region
      %250 = dma.done [#allocation5], 256
    $region45: #{tpu_custom_call.1} parent=1 // pred_fallthru
      _
    %251 = vsyncpa [#allocation4], 1
    %252 = vsyncpa [#allocation7], 1
    %253 = vsyncpa [#allocation5], 1

</llo_original>
